<compile_context>
chip_gen: v7x
topology: tpu7x:2x2x1
jax: 0.10.0
libtpu: 0.0.40
codegen_flags: <defaults>
</compile_context>

<pallas_src>
import math

import jax
import jax.numpy as jnp
from jax.experimental import pallas as pl
from jax.experimental.pallas import tpu as pltpu


_D_CHUNK = 128               # lanes of D accumulated per step (one vreg width)
_STEP_OVERHEAD_ROWS = 96     # ~0.35us per grid step expressed in "rows of HBM work"


def _sgns_score_kernel(v_ref, u_ref, o_ref):
    """o[b, k] = sigmoid(sum_d v[b, d] * u[k, b, d]) for one batch tile."""
    num_ctx, tb, dim = u_ref.shape
    cw = min(_D_CHUNK, dim)                     # accumulator lane width
    cols = []
    for k in range(num_ctx):                    # static unroll over context/negatives
        acc = jnp.zeros((tb, cw), jnp.float32)
        for d0 in range(0, dim, _D_CHUNK):      # static unroll over D chunks
            dc = min(_D_CHUNK, dim - d0)
            v_c = v_ref[:, d0:d0 + dc].astype(jnp.float32)       # (TB, dc)
            u_c = u_ref[k, :, d0:d0 + dc].astype(jnp.float32)    # (TB, dc)
            prod = v_c * u_c
            if dc < cw:
                # Ragged tail chunk: pad with zeros to the accumulator width
                # (cheap VALU/copy work, avoids a second cross-lane reduce).
                prod = jnp.concatenate(
                    [prod, jnp.zeros((tb, cw - dc), jnp.float32)], axis=1)
            acc = acc + prod                    # pure VALU adds, no per-chunk reduce
        # Single cross-lane (XLU) reduce per k; result stays in its natural
        # (TB, 1) sublane layout -- no relayout needed for the (TB, K) store.
        cols.append(jnp.sum(acc, axis=-1, keepdims=True))
    dots = jnp.concatenate(cols, axis=1)        # (TB, K) float32
    # Exact sigmoid (output tensor is tiny, so exactness costs nothing).
    o_ref[...] = (1.0 / (1.0 + jnp.exp(-dots))).astype(o_ref.dtype)


def _vmem_capacity_bytes():
    """Best-effort query of per-core VMEM capacity; conservative fallback."""
    try:
        info = pltpu.get_tpu_info()
        for attr in ("vmem_capacity_bytes", "vmem_size_bytes", "vmem_bytes"):
            val = getattr(info, attr, None)
            if val:
                return int(val)
    except Exception:
        pass
    return 64 * 1024 * 1024    # v7x-safe fallback


def _choose_batch_tile(batch, k, dim, itemsize):
    """Pick TB / padded batch / scoped-VMEM limit.

    Generation-aware budget (~20 MiB on 64 MiB-VMEM v7x, ~40 MiB on 128 MiB
    v5e/v6e); among feasible 128-multiples, minimize batch-padding waste plus
    per-step overhead, preferring an even number of grid steps (2-TC balance).
    """
    capacity = _vmem_capacity_bytes()
    budget = (capacity * 5) // 16
    # Double-buffered v/u/out blocks + in-kernel f32 temporaries, per batch row.
    per_row = 2 * (k + 1) * dim * itemsize + 8 * k + 2048
    max_tb = budget // max(per_row, 1)
    max_tb = max(128, min(1024, (max_tb // 128) * 128))

    b8 = -(-batch // 8) * 8
    if b8 <= max_tb:
        tb, b_pad = b8, b8                     # single sublane-aligned tile
    else:
        best = None
        for tb_c in range(128, max_tb + 1, 128):
            steps = -(-batch // tb_c)
            padded = steps * tb_c
            score = padded + steps * _STEP_OVERHEAD_ROWS
            key = (score, steps % 2, -tb_c)    # waste, then even steps, then big tiles
            if best is None or key < best[0]:
                best = (key, tb_c, padded)
        tb, b_pad = best[1], best[2]

    tile_bytes = per_row * tb
    vmem_limit = int(min(capacity - (8 << 20),
                         max(32 << 20, tile_bytes + (8 << 20))))
    return tb, b_pad, vmem_limit


def _pallas_scores(v, u, tb, vmem_limit):
    num_ctx, b_pad, dim = u.shape
    return pl.pallas_call(
        _sgns_score_kernel,
        out_shape=jax.ShapeDtypeStruct((b_pad, num_ctx), jnp.float32),
        grid=(b_pad // tb,),
        in_specs=[
            pl.BlockSpec((tb, dim), lambda i: (i, 0)),              # center v block
            pl.BlockSpec((num_ctx, tb, dim), lambda i: (0, i, 0)),  # context u block
        ],
        out_specs=pl.BlockSpec((tb, num_ctx), lambda i: (i, 0)),    # (B, K) scores
        compiler_params=pltpu.CompilerParams(
            dimension_semantics=("parallel",),
            vmem_limit_bytes=vmem_limit,
        ),
    )(v, u)


def sgns_forward(u_table, v_table, centers, context_and_negatives,
                 table_dtype=jnp.bfloat16):
    """Forward pass of EmbeddingModel.

    Args:
      u_table: (vocab, dim) float32/bfloat16  -- u_embeds.weight
      v_table: (vocab, dim) float32/bfloat16  -- v_embeds.weight
      centers: (B,) int32
      context_and_negatives: (B, K) int32
      table_dtype: storage dtype for the tables on the hot path (bfloat16
        halves HBM traffic of this memory-bound op; accumulation stays f32).
        Pass None to keep the incoming dtype.
    Returns:
      (B, K) float32 sigmoid scores.
    """
    batch, k = context_and_negatives.shape
    dim = u_table.shape[1]

    if table_dtype is not None and u_table.dtype != table_dtype:
        u_table = u_table.astype(table_dtype)
        v_table = v_table.astype(table_dtype)

    tb, b_pad, vmem_limit = _choose_batch_tile(
        batch, k, dim, u_table.dtype.itemsize)

    # Pad the (cheap) index arrays, not the gathered tensors, so padded rows
    # are produced by the gather itself (no extra HBM pass over u).
    if b_pad != batch:
        centers = jnp.pad(centers, (0, b_pad - batch))
        context_and_negatives = jnp.pad(
            context_and_negatives, ((0, b_pad - batch), (0, 0)))

    # Embedding lookups (nn.Embedding).  u is gathered in (K, B, D) layout so
    # the kernel's per-k slice is a contiguous (TB, D) sub-block.
    v = jnp.take(v_table, centers, axis=0)                     # (B_pad, D)
    u = jnp.take(u_table, context_and_negatives.T, axis=0)     # (K, B_pad, D)

    scores = _pallas_scores(v, u, tb, vmem_limit)              # (B_pad, K)
    return scores[:batch]


def _reference(u_table, v_table, centers, context_and_negatives):
    v = jnp.take(v_table, centers, axis=0).astype(jnp.float32)
    u = jnp.take(u_table, context_and_negatives, axis=0).astype(jnp.float32)
    return jax.nn.sigmoid(jnp.einsum("bd,bkd->bk", v, u))


def _run_case(key, vocab_size, dim, batch, k):
    keys = jax.random.split(key, 4)
    max_w = 1.0 / math.sqrt(dim)
    u_table = jax.random.uniform(keys[0], (vocab_size, dim), jnp.float32, -max_w, max_w)
    v_table = jax.random.uniform(keys[1], (vocab_size, dim), jnp.float32, -max_w, max_w)
    centers = jax.random.randint(keys[2], (batch,), 0, vocab_size, jnp.int32)
    ctx = jax.random.randint(keys[3], (batch, k), 0, vocab_size, jnp.int32)

    out = jax.block_until_ready(sgns_forward(u_table, v_table, centers, ctx))
    ref = _reference(u_table, v_table, centers, ctx)
    assert out.shape == (batch, k), out.shape
    # atol covers the bf16 table storage (accumulation is f32, sigmoid exact).
    err = float(jnp.max(jnp.abs(out - ref)))
    assert jnp.allclose(out, ref, atol=5e-3, rtol=0.0), err


if __name__ == "__main__":
    root = jax.random.PRNGKey(0)
    k0, k1, k2 = jax.random.split(root, 3)

    # Small demo consistent with the module: vocab=100, dim=32, batch=2, K=8.
    _run_case(k0, vocab_size=100, dim=32, batch=2, k=8)

    # Exercises multi-tile batch grid, batch padding and the ragged D tail chunk.
    _run_case(k1, vocab_size=1000, dim=200, batch=2500, k=8)

    # Odd K (< 8 lanes) and odd batch (padded to the sublane multiple).
    _run_case(k2, vocab_size=50, dim=16, batch=3, k=5)

    print("KERNEL_OK")
</pallas_src>

<mosaic_0001>
module attributes {stable_mosaic.version = 11 : i64} {
  func.func @_sgns_score_kernel(%arg0: i32, %arg1: memref<8x32xbf16, #tpu.memory_space<vmem>>, %arg2: memref<8x8x32xbf16, #tpu.memory_space<vmem>>, %arg3: memref<8x8xf32, #tpu.memory_space<vmem>>) attributes {dimension_semantics = [#tpu.dimension_semantics<parallel>], iteration_bounds = array<i64: 1>, scalar_prefetch = 0 : i64, scratch_operands = 0 : i64, tpu.core_type = #tpu.core_type<tc>, window_params = [{transform_indices = @transform_0, window_bounds = array<i64: 8, 32>}, {transform_indices = @transform_1, window_bounds = array<i64: 8, 8, 32>}, {transform_indices = @transform_2, window_bounds = array<i64: 8, 8>}]} {
    %cst = arith.constant 0.000000e+00 : f32
    %0 = vector.broadcast %cst : f32 to vector<8x32xf32>
    %c0 = arith.constant 0 : index
    %c0_0 = arith.constant 0 : index
    %1 = vector.load %arg1[%c0, %c0_0] : memref<8x32xbf16, #tpu.memory_space<vmem>>, vector<8x32xbf16>
    %2 = arith.extf %1 : vector<8x32xbf16> to vector<8x32xf32>
    %c0_1 = arith.constant 0 : index
    %c0_2 = arith.constant 0 : index
    %c0_3 = arith.constant 0 : index
    %3 = vector.load %arg2[%c0_1, %c0_2, %c0_3] : memref<8x8x32xbf16, #tpu.memory_space<vmem>>, vector<1x8x32xbf16>
    %4 = vector.shape_cast %3 : vector<1x8x32xbf16> to vector<8x32xbf16>
    %5 = arith.extf %4 : vector<8x32xbf16> to vector<8x32xf32>
    %6 = arith.mulf %2, %5 : vector<8x32xf32>
    %7 = arith.addf %0, %6 : vector<8x32xf32>
    %cst_4 = arith.constant dense<0.000000e+00> : vector<8xf32>
    %8 = vector.multi_reduction <add>, %7, %cst_4 [1] : vector<8x32xf32> to vector<8xf32>
    %9 = vector.shape_cast %8 : vector<8xf32> to vector<8x1xf32>
    %cst_5 = arith.constant 0.000000e+00 : f32
    %10 = vector.broadcast %cst_5 : f32 to vector<8x32xf32>
    %c0_6 = arith.constant 0 : index
    %c0_7 = arith.constant 0 : index
    %11 = vector.load %arg1[%c0_6, %c0_7] : memref<8x32xbf16, #tpu.memory_space<vmem>>, vector<8x32xbf16>
    %12 = arith.extf %11 : vector<8x32xbf16> to vector<8x32xf32>
    %c1 = arith.constant 1 : index
    %c0_8 = arith.constant 0 : index
    %c0_9 = arith.constant 0 : index
    %13 = vector.load %arg2[%c1, %c0_8, %c0_9] : memref<8x8x32xbf16, #tpu.memory_space<vmem>>, vector<1x8x32xbf16>
    %14 = vector.shape_cast %13 : vector<1x8x32xbf16> to vector<8x32xbf16>
    %15 = arith.extf %14 : vector<8x32xbf16> to vector<8x32xf32>
    %16 = arith.mulf %12, %15 : vector<8x32xf32>
    %17 = arith.addf %10, %16 : vector<8x32xf32>
    %cst_10 = arith.constant dense<0.000000e+00> : vector<8xf32>
    %18 = vector.multi_reduction <add>, %17, %cst_10 [1] : vector<8x32xf32> to vector<8xf32>
    %19 = vector.shape_cast %18 : vector<8xf32> to vector<8x1xf32>
    %cst_11 = arith.constant 0.000000e+00 : f32
    %20 = vector.broadcast %cst_11 : f32 to vector<8x32xf32>
    %c0_12 = arith.constant 0 : index
    %c0_13 = arith.constant 0 : index
    %21 = vector.load %arg1[%c0_12, %c0_13] : memref<8x32xbf16, #tpu.memory_space<vmem>>, vector<8x32xbf16>
    %22 = arith.extf %21 : vector<8x32xbf16> to vector<8x32xf32>
    %c2 = arith.constant 2 : index
    %c0_14 = arith.constant 0 : index
    %c0_15 = arith.constant 0 : index
    %23 = vector.load %arg2[%c2, %c0_14, %c0_15] : memref<8x8x32xbf16, #tpu.memory_space<vmem>>, vector<1x8x32xbf16>
    %24 = vector.shape_cast %23 : vector<1x8x32xbf16> to vector<8x32xbf16>
    %25 = arith.extf %24 : vector<8x32xbf16> to vector<8x32xf32>
    %26 = arith.mulf %22, %25 : vector<8x32xf32>
    %27 = arith.addf %20, %26 : vector<8x32xf32>
    %cst_16 = arith.constant dense<0.000000e+00> : vector<8xf32>
    %28 = vector.multi_reduction <add>, %27, %cst_16 [1] : vector<8x32xf32> to vector<8xf32>
    %29 = vector.shape_cast %28 : vector<8xf32> to vector<8x1xf32>
    %cst_17 = arith.constant 0.000000e+00 : f32
    %30 = vector.broadcast %cst_17 : f32 to vector<8x32xf32>
    %c0_18 = arith.constant 0 : index
    %c0_19 = arith.constant 0 : index
    %31 = vector.load %arg1[%c0_18, %c0_19] : memref<8x32xbf16, #tpu.memory_space<vmem>>, vector<8x32xbf16>
    %32 = arith.extf %31 : vector<8x32xbf16> to vector<8x32xf32>
    %c3 = arith.constant 3 : index
    %c0_20 = arith.constant 0 : index
    %c0_21 = arith.constant 0 : index
    %33 = vector.load %arg2[%c3, %c0_20, %c0_21] : memref<8x8x32xbf16, #tpu.memory_space<vmem>>, vector<1x8x32xbf16>
    %34 = vector.shape_cast %33 : vector<1x8x32xbf16> to vector<8x32xbf16>
    %35 = arith.extf %34 : vector<8x32xbf16> to vector<8x32xf32>
    %36 = arith.mulf %32, %35 : vector<8x32xf32>
    %37 = arith.addf %30, %36 : vector<8x32xf32>
    %cst_22 = arith.constant dense<0.000000e+00> : vector<8xf32>
    %38 = vector.multi_reduction <add>, %37, %cst_22 [1] : vector<8x32xf32> to vector<8xf32>
    %39 = vector.shape_cast %38 : vector<8xf32> to vector<8x1xf32>
    %cst_23 = arith.constant 0.000000e+00 : f32
    %40 = vector.broadcast %cst_23 : f32 to vector<8x32xf32>
    %c0_24 = arith.constant 0 : index
    %c0_25 = arith.constant 0 : index
    %41 = vector.load %arg1[%c0_24, %c0_25] : memref<8x32xbf16, #tpu.memory_space<vmem>>, vector<8x32xbf16>
    %42 = arith.extf %41 : vector<8x32xbf16> to vector<8x32xf32>
    %c4 = arith.constant 4 : index
    %c0_26 = arith.constant 0 : index
    %c0_27 = arith.constant 0 : index
    %43 = vector.load %arg2[%c4, %c0_26, %c0_27] : memref<8x8x32xbf16, #tpu.memory_space<vmem>>, vector<1x8x32xbf16>
    %44 = vector.shape_cast %43 : vector<1x8x32xbf16> to vector<8x32xbf16>
    %45 = arith.extf %44 : vector<8x32xbf16> to vector<8x32xf32>
    %46 = arith.mulf %42, %45 : vector<8x32xf32>
    %47 = arith.addf %40, %46 : vector<8x32xf32>
    %cst_28 = arith.constant dense<0.000000e+00> : vector<8xf32>
    %48 = vector.multi_reduction <add>, %47, %cst_28 [1] : vector<8x32xf32> to vector<8xf32>
    %49 = vector.shape_cast %48 : vector<8xf32> to vector<8x1xf32>
    %cst_29 = arith.constant 0.000000e+00 : f32
    %50 = vector.broadcast %cst_29 : f32 to vector<8x32xf32>
    %c0_30 = arith.constant 0 : index
    %c0_31 = arith.constant 0 : index
    %51 = vector.load %arg1[%c0_30, %c0_31] : memref<8x32xbf16, #tpu.memory_space<vmem>>, vector<8x32xbf16>
    %52 = arith.extf %51 : vector<8x32xbf16> to vector<8x32xf32>
    %c5 = arith.constant 5 : index
    %c0_32 = arith.constant 0 : index
    %c0_33 = arith.constant 0 : index
    %53 = vector.load %arg2[%c5, %c0_32, %c0_33] : memref<8x8x32xbf16, #tpu.memory_space<vmem>>, vector<1x8x32xbf16>
    %54 = vector.shape_cast %53 : vector<1x8x32xbf16> to vector<8x32xbf16>
    %55 = arith.extf %54 : vector<8x32xbf16> to vector<8x32xf32>
    %56 = arith.mulf %52, %55 : vector<8x32xf32>
    %57 = arith.addf %50, %56 : vector<8x32xf32>
    %cst_34 = arith.constant dense<0.000000e+00> : vector<8xf32>
    %58 = vector.multi_reduction <add>, %57, %cst_34 [1] : vector<8x32xf32> to vector<8xf32>
    %59 = vector.shape_cast %58 : vector<8xf32> to vector<8x1xf32>
    %cst_35 = arith.constant 0.000000e+00 : f32
    %60 = vector.broadcast %cst_35 : f32 to vector<8x32xf32>
    %c0_36 = arith.constant 0 : index
    %c0_37 = arith.constant 0 : index
    %61 = vector.load %arg1[%c0_36, %c0_37] : memref<8x32xbf16, #tpu.memory_space<vmem>>, vector<8x32xbf16>
    %62 = arith.extf %61 : vector<8x32xbf16> to vector<8x32xf32>
    %c6 = arith.constant 6 : index
    %c0_38 = arith.constant 0 : index
    %c0_39 = arith.constant 0 : index
    %63 = vector.load %arg2[%c6, %c0_38, %c0_39] : memref<8x8x32xbf16, #tpu.memory_space<vmem>>, vector<1x8x32xbf16>
    %64 = vector.shape_cast %63 : vector<1x8x32xbf16> to vector<8x32xbf16>
    %65 = arith.extf %64 : vector<8x32xbf16> to vector<8x32xf32>
    %66 = arith.mulf %62, %65 : vector<8x32xf32>
    %67 = arith.addf %60, %66 : vector<8x32xf32>
    %cst_40 = arith.constant dense<0.000000e+00> : vector<8xf32>
    %68 = vector.multi_reduction <add>, %67, %cst_40 [1] : vector<8x32xf32> to vector<8xf32>
    %69 = vector.shape_cast %68 : vector<8xf32> to vector<8x1xf32>
    %cst_41 = arith.constant 0.000000e+00 : f32
    %70 = vector.broadcast %cst_41 : f32 to vector<8x32xf32>
    %c0_42 = arith.constant 0 : index
    %c0_43 = arith.constant 0 : index
    %71 = vector.load %arg1[%c0_42, %c0_43] : memref<8x32xbf16, #tpu.memory_space<vmem>>, vector<8x32xbf16>
    %72 = arith.extf %71 : vector<8x32xbf16> to vector<8x32xf32>
    %c7 = arith.constant 7 : index
    %c0_44 = arith.constant 0 : index
    %c0_45 = arith.constant 0 : index
    %73 = vector.load %arg2[%c7, %c0_44, %c0_45] : memref<8x8x32xbf16, #tpu.memory_space<vmem>>, vector<1x8x32xbf16>
    %74 = vector.shape_cast %73 : vector<1x8x32xbf16> to vector<8x32xbf16>
    %75 = arith.extf %74 : vector<8x32xbf16> to vector<8x32xf32>
    %76 = arith.mulf %72, %75 : vector<8x32xf32>
    %77 = arith.addf %70, %76 : vector<8x32xf32>
    %cst_46 = arith.constant dense<0.000000e+00> : vector<8xf32>
    %78 = vector.multi_reduction <add>, %77, %cst_46 [1] : vector<8x32xf32> to vector<8xf32>
    %79 = vector.shape_cast %78 : vector<8xf32> to vector<8x1xf32>
    %80 = tpu.concatenate %9, %19, %29, %39, %49, %59, %69, %79 in 1 : vector<8x1xf32>, vector<8x1xf32>, vector<8x1xf32>, vector<8x1xf32>, vector<8x1xf32>, vector<8x1xf32>, vector<8x1xf32>, vector<8x1xf32> -> vector<8x8xf32>
    %cst_47 = arith.constant 0.000000e+00 : f32
    %81 = vector.broadcast %cst_47 : f32 to vector<8x8xf32>
    %82 = arith.subf %81, %80 : vector<8x8xf32>
    %83 = math.exp %82 : vector<8x8xf32>
    %cst_48 = arith.constant 1.000000e+00 : f32
    %84 = vector.broadcast %cst_48 : f32 to vector<8x8xf32>
    %85 = arith.addf %84, %83 : vector<8x8xf32>
    %cst_49 = arith.constant 1.000000e+00 : f32
    %86 = vector.broadcast %cst_49 : f32 to vector<8x8xf32>
    %87 = arith.divf %86, %85 : vector<8x8xf32>
    %c0_50 = arith.constant 0 : index
    %c0_51 = arith.constant 0 : index
    %88 = vector.load %arg3[%c0_50, %c0_51] : memref<8x8xf32, #tpu.memory_space<vmem>>, vector<8x8xf32>
    tpu.vector_store %arg3[%c0_50, %c0_51], %87 {strides = array<i32>} : memref<8x8xf32, #tpu.memory_space<vmem>>, vector<8x8xf32>,
    return
  }
  func.func @transform_0(%arg0: i32) -> (i32, i32) {
    %c0_i32 = arith.constant 0 : i32
    %c0_i32_0 = arith.constant 0 : i32
    return %arg0, %c0_i32 : i32, i32
  }
  func.func @transform_1(%arg0: i32) -> (i32, i32, i32) {
    %c0_i32 = arith.constant 0 : i32
    %c0_i32_0 = arith.constant 0 : i32
    %c0_i32_1 = arith.constant 0 : i32
    return %c0_i32, %arg0, %c0_i32_0 : i32, i32, i32
  }
  func.func @transform_2(%arg0: i32) -> (i32, i32) {
    %c0_i32 = arith.constant 0 : i32
    %c0_i32_0 = arith.constant 0 : i32
    return %arg0, %c0_i32 : i32, i32
  }
}

</mosaic_0001>

<llo_original>
// kernel: tpu_custom_call.1
$region0: #{tpu_custom_call.1}
  #allocation0 [shape = 'u32[]', space=smem, size = 0x4, offset = 0x4, fixed_abs, tag = 'smem constant byte address 0x4 - core index']
  #allocation1 [shape = 'u32[144,128]{1,0:T(1,128)}', space=vmem, size = 0x12000, scoped, tag = 'internal scratch']
  %s0 = inlined_call_operand.hbm [shape: bf16[8,32], index: 0, kind: input, shape index: {}]
  %s1 = inlined_call_operand.hbm [shape: bf16[8,8,32], index: 1, kind: input, shape index: {}]
  %s2 = inlined_call_operand.hbm [shape: f32[8,8], index: 2, kind: output, shape index: {}]
  %s3 = sld [smem:[#allocation0]]
  $region26: #{tpu_custom_call.1} parent=0
    _
  %s5 = ssub.s32 1, %s3
  %s6 = scalar_select 0, %s5, %s3
  $region1: #{tpu_custom_call.1} parent=0
    #allocation2 [shape = 'u8[2048]{0}', space=vmem, size = 0x800, scoped, tag = 'input window, operand 0, single buffered']
    #allocation3 [shape = 's32[1]{0}', space=sflag, size = 0x4, scoped, tag = 'scoped memory for tpu_custom_call.1']
    #allocation4 [shape = 's32[1]{0}', space=sflag, size = 0x4, scoped, tag = 'scoped memory for tpu_custom_call.1']
    #allocation5 [shape = 'u8[16384]{0}', space=vmem, size = 0x4000, scoped, tag = 'input window, operand 1, single buffered']
    #allocation6 [shape = 's32[1]{0}', space=sflag, size = 0x4, scoped, tag = 'scoped memory for tpu_custom_call.1']
    #allocation7 [shape = 'u8[4096]{0}', space=vmem, size = 0x1000, scoped, tag = 'output window, operand 0, single buffered']
    %7 = vsyncpa [#allocation3], 0
    %8 = vsyncpa [#allocation6], 0
    %9 = vsyncpa [#allocation4], 0
    // Predicated region
    $region2: #{tpu_custom_call.1} parent=1 // pred_check
      _
    $region3: #{tpu_custom_call.1} parent=1 // pred_check_branch
      %11 = sbr.rel (0) target = $region5
    $region4: #{tpu_custom_call.1} parent=1 // pred_region
      %s13 = ssub.s32 64, 64
      %14 = vsyncadd [#allocation3], %s13
      %s16 = sshll.u32 [#allocation2], 4
      %s17 = int_to_ptr.vmem [resolvable:$true] %s16
      %19 = dma.hbm_to_vmem [thread:$0]  %s0, 64, %s17, [#allocation3]
    $region5: #{tpu_custom_call.1} parent=1 // pred_fallthru
      _
    // Predicated region
    $region6: #{tpu_custom_call.1} parent=1 // pred_check
      _
    $region7: #{tpu_custom_call.1} parent=1 // pred_check_branch
      %21 = sbr.rel (0) target = $region9
    $region8: #{tpu_custom_call.1} parent=1 // pred_region
      %s23 = ssub.s32 512, 512
      %24 = vsyncadd [#allocation6], %s23
      %s25 = sshll.u32 [#allocation5], 4
      %s26 = int_to_ptr.vmem [resolvable:$true] %s25
      %31 = dma.hbm_to_vmem [thread:$0]  %s1, 512, %s26, [#allocation6], 64, 64, 4
    $region9: #{tpu_custom_call.1} parent=1 // pred_fallthru
      _
    // Predicated region
    $region10: #{tpu_custom_call.1} parent=1 // pred_check
      _
    $region11: #{tpu_custom_call.1} parent=1 // pred_check_branch
      %33 = sbr.rel (0) target = $region13
    $region12: #{tpu_custom_call.1} parent=1 // pred_region
      %34 = dma.done [#allocation3], 64
    $region13: #{tpu_custom_call.1} parent=1 // pred_fallthru
      _
    // Predicated region
    $region14: #{tpu_custom_call.1} parent=1 // pred_check
      _
    $region15: #{tpu_custom_call.1} parent=1 // pred_check_branch
      %36 = sbr.rel (0) target = $region17
    $region16: #{tpu_custom_call.1} parent=1 // pred_region
      %37 = dma.done [#allocation6], 512
    $region17: #{tpu_custom_call.1} parent=1 // pred_fallthru
      _
    %v38 = vld [vmem:[#allocation2] sm:$0xf]
    %v39 = vunpack.c.l.bf16 %v38
    %v40 = vld [vmem:[#allocation5] sm:$0xf]
    %v41 = vunpack.c.l.bf16 %v40
    %v42 = vmul.f32 %v39, %v41
    %v43 = vadd.f32 %v42, 0.0
    %vm44 = vcmask 261120
    %v45 = vsel %vm44, %v43, 0.0
    %46 = vadd.xlane.f32.xlu0 %v45
    %v47 = vpop.xlane.xlu0 %46
    %s48 = scalar_lea.vmem [#allocation5], 4
    %v49 = vld [vmem:[%s48] sm:$0xf]
    %v50 = vunpack.c.l.bf16 %v49
    %v51 = vmul.f32 %v39, %v50
    %v52 = vadd.f32 %v51, 0.0
    %v53 = vsel %vm44, %v52, 0.0
    %54 = vadd.xlane.f32.xlu0 %v53
    %v55 = vpop.xlane.xlu0 %54
    %s56 = scalar_lea.vmem [#allocation5], 8
    %v57 = vld [vmem:[%s56] sm:$0xf]
    %v58 = vunpack.c.l.bf16 %v57
    %v59 = vmul.f32 %v39, %v58
    %v60 = vadd.f32 %v59, 0.0
    %v61 = vsel %vm44, %v60, 0.0
    %62 = vadd.xlane.f32.xlu0 %v61
    %v63 = vpop.xlane.xlu0 %62
    %s64 = scalar_lea.vmem [#allocation5], 12
    %v65 = vld [vmem:[%s64] sm:$0xf]
    %v66 = vunpack.c.l.bf16 %v65
    %v67 = vmul.f32 %v39, %v66
    %v68 = vadd.f32 %v67, 0.0
    %v69 = vsel %vm44, %v68, 0.0
    %70 = vadd.xlane.f32.xlu0 %v69
    %v71 = vpop.xlane.xlu0 %70
    %s72 = scalar_lea.vmem [#allocation5], 16
    %v73 = vld [vmem:[%s72] sm:$0xf]
    %v74 = vunpack.c.l.bf16 %v73
    %v75 = vmul.f32 %v39, %v74
    %v76 = vadd.f32 %v75, 0.0
    %v77 = vsel %vm44, %v76, 0.0
    %78 = vadd.xlane.f32.xlu0 %v77
    %v79 = vpop.xlane.xlu0 %78
    %s80 = scalar_lea.vmem [#allocation5], 20
    %v81 = vld [vmem:[%s80] sm:$0xf]
    %v82 = vunpack.c.l.bf16 %v81
    %v83 = vmul.f32 %v39, %v82
    %v84 = vadd.f32 %v83, 0.0
    %v85 = vsel %vm44, %v84, 0.0
    %86 = vadd.xlane.f32.xlu0 %v85
    %v87 = vpop.xlane.xlu0 %86
    %s88 = scalar_lea.vmem [#allocation5], 24
    %v89 = vld [vmem:[%s88] sm:$0xf]
    %v90 = vunpack.c.l.bf16 %v89
    %v91 = vmul.f32 %v39, %v90
    %v92 = vadd.f32 %v91, 0.0
    %v93 = vsel %vm44, %v92, 0.0
    %94 = vadd.xlane.f32.xlu0 %v93
    %v95 = vpop.xlane.xlu0 %94
    %s96 = scalar_lea.vmem [#allocation5], 28
    %v97 = vld [vmem:[%s96] sm:$0xf]
    %v98 = vunpack.c.l.bf16 %v97
    %v99 = vmul.f32 %v39, %v98
    %v100 = vadd.f32 %v99, 0.0
    %v101 = vsel %vm44, %v100, 0.0
    %102 = vadd.xlane.f32.xlu0 %v101
    %v103 = vpop.xlane.xlu0 %102
    %vm104 = vcmask 7168
    %v105 = vsel %vm104, %v47, %v55
    %vm106 = vcmask 15360
    %v107 = vsel %vm106, %v105, %v63
    %vm108 = vcmask 23552
    %v109 = vsel %vm108, %v107, %v71
    %vm110 = vcmask 31744
    %v111 = vsel %vm110, %v109, %v79
    %vm112 = vcmask 39936
    %v113 = vsel %vm112, %v111, %v87
    %vm114 = vcmask 48128
    %v115 = vsel %vm114, %v113, %v95
    %vm116 = vcmask 56320
    %v117 = vsel %vm116, %v115, %v103
    %v118 = vsub.f32 0.0, %v117
    %v119 = vmul.f32 %v118, 1.442695
    %v120 = vpow.pop %v119
    %v121 = vadd.f32 %v120, 1.0
    %v122 = vrcp.pop %v121
    %v123 = vmul.f32 1.0, %v122
    %vm124 = vcmask 64512
    %125 = vst.msk [vmem:[#allocation7] sm:$0xff] %vm124, %v123
    // Predicated region
    $region18: #{tpu_custom_call.1} parent=1 // pred_check
      _
    $region19: #{tpu_custom_call.1} parent=1 // pred_check_branch
      %127 = sbr.rel (0) target = $region21
    $region20: #{tpu_custom_call.1} parent=1 // pred_region
      %s129 = ssub.s32 128, 128
      %130 = vsyncadd [#allocation4], %s129
      %s132 = sshll.u32 [#allocation7], 4
      %s133 = int_to_ptr.vmem [resolvable:$true] %s132
      %135 = dma.vmem_to_hbm [thread:$0]  %s133, 128, %s2, [#allocation4]
    $region21: #{tpu_custom_call.1} parent=1 // pred_fallthru
      _
    // Predicated region
    $region22: #{tpu_custom_call.1} parent=1 // pred_check
      _
    $region23: #{tpu_custom_call.1} parent=1 // pred_check_branch
      %137 = sbr.rel (0) target = $region25
    $region24: #{tpu_custom_call.1} parent=1 // pred_region
      %138 = dma.done [#allocation4], 128
    $region25: #{tpu_custom_call.1} parent=1 // pred_fallthru
      _
    %139 = vsyncpa [#allocation3], 1
    %140 = vsyncpa [#allocation6], 1
    %141 = vsyncpa [#allocation4], 1

</llo_original>
